<compile_context>
chip_gen: v7x
topology: tpu7x:2x2x1
jax: 0.10.0
libtpu: 0.0.40
codegen_flags: <defaults>
</compile_context>

<pallas_src>
import functools
import math

import jax
import jax.numpy as jnp
from jax.experimental import pallas as pl
from jax.experimental.pallas import tpu as pltpu

LANE = 128                    # vreg lane width
SUBLANE = 8                   # f32 sublane count
_MIN_BLOCK = SUBLANE * LANE   # 1024 elements = one (8,128) f32 tile
_LOG_EPS = math.log(1e-12)    # matches torch .clamp(1e-12, 1e12) on pt


def _bce_focal_kernel(n_ref, x_ref, t_ref, o_ref, *, gamma, alpha, bm, needs_mask):
    i = pl.program_id(0)

    x = x_ref[...].astype(jnp.float32)
    t = t_ref[...].astype(jnp.float32)

    # Numerically stable sigmoid / log-sigmoid sharing one exp + one log1p (EUP),
    # everything else on the VPU.
    e = jnp.exp(-jnp.abs(x))
    log1pe = jnp.log1p(e)
    log_pt = jnp.minimum(x, 0.0) - log1pe            # log(sigmoid(x))
    log_1mpt = jnp.minimum(-x, 0.0) - log1pe         # log(1 - sigmoid(x)), no -inf
    # torch clamps pt to [1e-12, 1e12]; only the lower bound can change the math.
    log_pt = jnp.maximum(log_pt, _LOG_EPS)

    inv = 1.0 / (1.0 + e)
    pt = jnp.where(x >= 0.0, 1.0, e) * inv           # sigmoid(x), no cancellation
    one_m_pt = jnp.where(x >= 0.0, e, 1.0) * inv     # 1 - sigmoid(x)

    if gamma == 2.0:                                 # VPU squares instead of pow
        mod_pos = one_m_pt * one_m_pt
        mod_neg = pt * pt
    elif gamma == 1.0:
        mod_pos = one_m_pt
        mod_neg = pt
    else:
        mod_pos = one_m_pt ** gamma
        mod_neg = pt ** gamma

    loss = (-alpha) * mod_pos * t * log_pt \
           - (1.0 - alpha) * mod_neg * (1.0 - t) * log_1mpt

    def _write(tile):
        # Per-block partial sums as one lane-dense (8,128) vreg: no carried
        # state across the grid, cross-lane reduction deferred to XLA.
        o_ref[...] = jnp.sum(tile.reshape(-1, SUBLANE, LANE), axis=0)

    if needs_mask:
        is_last = i == pl.num_programs(0) - 1

        @pl.when(jnp.logical_not(is_last))
        def _():
            _write(loss)

        @pl.when(is_last)
        def _():
            rows = jax.lax.broadcasted_iota(jnp.int32, (bm, LANE), 0)
            cols = jax.lax.broadcasted_iota(jnp.int32, (bm, LANE), 1)
            local = rows * LANE + cols               # index within this block
            rem = n_ref[0] - i * (bm * LANE)         # valid elements remaining
            _write(jnp.where(local < rem, loss, 0.0))
    else:
        _write(loss)


def bce_focal_loss(_input, target, avg_factor, gamma=2.0, alpha=0.25,
                   use_sigmoid=True, reduction='sum', loss_weight=1.0, bm=512):
    """Pallas implementation of BCEFocalLoss.forward (use_sigmoid=True)."""
    if not use_sigmoid:
        raise NotImplementedError  # matches the PyTorch module
    n = _input.size
    xf = _input.reshape(-1)
    tf = target.reshape(-1)

    # Pad (only when necessary) up to a multiple of one (8,128) tile so the
    # lane-dense reshape and the in-kernel (8,128) partial sums stay aligned.
    n_pad = pl.cdiv(n, _MIN_BLOCK) * _MIN_BLOCK
    if n_pad != n:
        xf = jnp.pad(xf, (0, n_pad - n))
        tf = jnp.pad(tf, (0, n_pad - n))
    xp = xf.reshape(-1, LANE)
    tp = tf.reshape(-1, LANE)
    rows = xp.shape[0]

    bm = min(bm, rows)                       # rows and bm are multiples of 8
    grid = (pl.cdiv(rows, bm),)
    needs_mask = grid[0] * bm * LANE != n    # any padded / ragged tail?

    n_arr = jnp.array([n], jnp.int32)
    kernel = functools.partial(_bce_focal_kernel, gamma=float(gamma),
                               alpha=float(alpha), bm=bm, needs_mask=needs_mask)

    partials = pl.pallas_call(
        kernel,
        out_shape=jax.ShapeDtypeStruct((grid[0] * SUBLANE, LANE), jnp.float32),
        grid_spec=pltpu.PrefetchScalarGridSpec(
            num_scalar_prefetch=1,
            grid=grid,
            in_specs=[
                pl.BlockSpec((bm, LANE), lambda i, n: (i, 0)),
                pl.BlockSpec((bm, LANE), lambda i, n: (i, 0)),
            ],
            out_specs=pl.BlockSpec((SUBLANE, LANE), lambda i, n: (i, 0)),
        ),
        compiler_params=pltpu.CompilerParams(
            dimension_semantics=("parallel",)),
    )(n_arr, xp, tp)

    s = jnp.sum(partials)

    if reduction == 'elementwise_mean':
        return loss_weight * s / n
    elif reduction == 'sum':
        return loss_weight * s / avg_factor
    # TODO(synk): PyTorch returns the unreduced elementwise loss tensor for any
    # other `reduction`; only the two reduced flavors are implemented here.
    raise NotImplementedError(f"reduction={reduction!r}")


def _reference(_input, target, avg_factor, gamma=2.0, alpha=0.25,
               reduction='sum', loss_weight=1.0):
    # Literal translation of the PyTorch forward.
    pt = jnp.clip(jax.nn.sigmoid(_input.astype(jnp.float32)), 1e-12, 1e12)
    t = target.astype(jnp.float32)
    loss = (-alpha * (1.0 - pt) ** gamma * t * jnp.log(pt)
            - (1.0 - alpha) * pt ** gamma * (1.0 - t) * jnp.log(1.0 - pt))
    if reduction == 'elementwise_mean':
        return loss_weight * jnp.mean(loss)
    return loss_weight * jnp.sum(loss) / avg_factor


if __name__ == "__main__":
    key = jax.random.PRNGKey(0)
    k1, k2 = jax.random.split(key)

    # NCHW-shaped logits / binary targets (module is purely elementwise+reduce).
    x = jax.random.normal(k1, (2, 4, 16, 16), dtype=jnp.float32) * 2.0
    target = (jax.random.uniform(k2, (2, 4, 16, 16)) > 0.8).astype(jnp.float32)
    avg_factor = jnp.maximum(jnp.sum(target), 1.0)

    out = bce_focal_loss(x, target, avg_factor,
                         gamma=2.0, alpha=0.25, reduction='sum',
                         loss_weight=1.0)
    out = jax.block_until_ready(out)

    ref = _reference(x, target, avg_factor)
    assert jnp.allclose(out, ref, rtol=1e-5, atol=1e-5), (out, ref)
    print("KERNEL_OK")
</pallas_src>

<mosaic_0001>
module attributes {stable_mosaic.version = 11 : i64} {
  func.func @_bce_focal_kernel(%arg0: i32, %arg1: memref<1xi32, #tpu.memory_space<smem>>, %arg2: memref<16x128xf32, #tpu.memory_space<vmem>>, %arg3: memref<16x128xf32, #tpu.memory_space<vmem>>, %arg4: memref<8x128xf32, #tpu.memory_space<vmem>>) attributes {dimension_semantics = [#tpu.dimension_semantics<parallel>], iteration_bounds = array<i64: 1>, scalar_prefetch = 1 : i64, scratch_operands = 0 : i64, tpu.core_type = #tpu.core_type<tc>, window_params = [{transform_indices = @transform_0, window_bounds = array<i64: 16, 128>}, {transform_indices = @transform_1, window_bounds = array<i64: 16, 128>}, {transform_indices = @transform_2, window_bounds = array<i64: 8, 128>}]} {
    %c0 = arith.constant 0 : index
    %c0_0 = arith.constant 0 : index
    %0 = vector.load %arg2[%c0, %c0_0] : memref<16x128xf32, #tpu.memory_space<vmem>>, vector<16x128xf32>
    %c0_1 = arith.constant 0 : index
    %c0_2 = arith.constant 0 : index
    %1 = vector.load %arg3[%c0_1, %c0_2] : memref<16x128xf32, #tpu.memory_space<vmem>>, vector<16x128xf32>
    %2 = math.absf %0 : vector<16x128xf32>
    %cst = arith.constant 0.000000e+00 : f32
    %3 = vector.broadcast %cst : f32 to vector<16x128xf32>
    %4 = arith.subf %3, %2 : vector<16x128xf32>
    %5 = math.exp %4 : vector<16x128xf32>
    %6 = math.log1p %5 : vector<16x128xf32>
    %cst_3 = arith.constant 0.000000e+00 : f32
    %7 = vector.broadcast %cst_3 : f32 to vector<16x128xf32>
    %8 = arith.minimumf %0, %7 : vector<16x128xf32>
    %9 = arith.subf %8, %6 : vector<16x128xf32>
    %cst_4 = arith.constant 0.000000e+00 : f32
    %10 = vector.broadcast %cst_4 : f32 to vector<16x128xf32>
    %11 = arith.subf %10, %0 : vector<16x128xf32>
    %cst_5 = arith.constant 0.000000e+00 : f32
    %12 = vector.broadcast %cst_5 : f32 to vector<16x128xf32>
    %13 = arith.minimumf %11, %12 : vector<16x128xf32>
    %14 = arith.subf %13, %6 : vector<16x128xf32>
    %cst_6 = arith.constant -27.6310215 : f32
    %15 = vector.broadcast %cst_6 : f32 to vector<16x128xf32>
    %16 = arith.maximumf %9, %15 : vector<16x128xf32>
    %cst_7 = arith.constant 1.000000e+00 : f32
    %17 = vector.broadcast %cst_7 : f32 to vector<16x128xf32>
    %18 = arith.addf %17, %5 : vector<16x128xf32>
    %cst_8 = arith.constant 1.000000e+00 : f32
    %19 = vector.broadcast %cst_8 : f32 to vector<16x128xf32>
    %20 = arith.divf %19, %18 : vector<16x128xf32>
    %cst_9 = arith.constant 0.000000e+00 : f32
    %21 = vector.broadcast %cst_9 : f32 to vector<16x128xf32>
    %22 = arith.cmpf oge, %0, %21 : vector<16x128xf32>
    %cst_10 = arith.constant 1.000000e+00 : f32
    %23 = vector.broadcast %cst_10 : f32 to vector<16x128xf32>
    %24 = arith.select %22, %23, %5 : vector<16x128xi1>, vector<16x128xf32>
    %25 = arith.mulf %24, %20 : vector<16x128xf32>
    %cst_11 = arith.constant 0.000000e+00 : f32
    %26 = vector.broadcast %cst_11 : f32 to vector<16x128xf32>
    %27 = arith.cmpf oge, %0, %26 : vector<16x128xf32>
    %cst_12 = arith.constant 1.000000e+00 : f32
    %28 = vector.broadcast %cst_12 : f32 to vector<16x128xf32>
    %29 = arith.select %27, %5, %28 : vector<16x128xi1>, vector<16x128xf32>
    %30 = arith.mulf %29, %20 : vector<16x128xf32>
    %31 = arith.mulf %30, %30 : vector<16x128xf32>
    %32 = arith.mulf %25, %25 : vector<16x128xf32>
    %cst_13 = arith.constant -2.500000e-01 : f32
    %33 = vector.broadcast %cst_13 : f32 to vector<16x128xf32>
    %34 = arith.mulf %33, %31 : vector<16x128xf32>
    %35 = arith.mulf %34, %1 : vector<16x128xf32>
    %36 = arith.mulf %35, %16 : vector<16x128xf32>
    %cst_14 = arith.constant 7.500000e-01 : f32
    %37 = vector.broadcast %cst_14 : f32 to vector<16x128xf32>
    %38 = arith.mulf %37, %32 : vector<16x128xf32>
    %cst_15 = arith.constant 1.000000e+00 : f32
    %39 = vector.broadcast %cst_15 : f32 to vector<16x128xf32>
    %40 = arith.subf %39, %1 : vector<16x128xf32>
    %41 = arith.mulf %38, %40 : vector<16x128xf32>
    %42 = arith.mulf %41, %14 : vector<16x128xf32>
    %43 = arith.subf %36, %42 : vector<16x128xf32>
    %44 = vector.shape_cast %43 : vector<16x128xf32> to vector<2x8x128xf32>
    %cst_16 = arith.constant dense<0.000000e+00> : vector<8x128xf32>
    %45 = vector.multi_reduction <add>, %44, %cst_16 [0] : vector<2x8x128xf32> to vector<8x128xf32>
    %c0_17 = arith.constant 0 : index
    %c0_18 = arith.constant 0 : index
    %46 = vector.load %arg4[%c0_17, %c0_18] : memref<8x128xf32, #tpu.memory_space<vmem>>, vector<8x128xf32>
    tpu.vector_store %arg4[%c0_17, %c0_18], %45 {strides = array<i32>} : memref<8x128xf32, #tpu.memory_space<vmem>>, vector<8x128xf32>,
    return
  }
  func.func @transform_0(%arg0: i32, %arg1: memref<1xi32, #tpu.memory_space<smem>>) -> (i32, i32) {
    %c0_i32 = arith.constant 0 : i32
    %c0_i32_0 = arith.constant 0 : i32
    return %arg0, %c0_i32 : i32, i32
  }
  func.func @transform_1(%arg0: i32, %arg1: memref<1xi32, #tpu.memory_space<smem>>) -> (i32, i32) {
    %c0_i32 = arith.constant 0 : i32
    %c0_i32_0 = arith.constant 0 : i32
    return %arg0, %c0_i32 : i32, i32
  }
  func.func @transform_2(%arg0: i32, %arg1: memref<1xi32, #tpu.memory_space<smem>>) -> (i32, i32) {
    %c0_i32 = arith.constant 0 : i32
    %c0_i32_0 = arith.constant 0 : i32
    return %arg0, %c0_i32 : i32, i32
  }
}

</mosaic_0001>

<llo_original>
// kernel: tpu_custom_call.1
$region0: #{tpu_custom_call.1}
  #allocation0 [shape = 'u32[]', space=smem, size = 0x4, offset = 0x4, fixed_abs, tag = 'smem constant byte address 0x4 - core index']
  #allocation1 [shape = 'u32[144,128]{1,0:T(1,128)}', space=vmem, size = 0x12000, scoped, tag = 'internal scratch']
  #allocation2 [shape = 's32[1]{0}', space=sflag, size = 0x4, scoped, tag = 'scoped memory for tpu_custom_call.1']
  #allocation3 [shape = 's32[1]{0:T(128)S(6)}', space=smem, size = 0x200, scoped, tag = 'prefetched SMEM operand 0']
  %s0 = inlined_call_operand.<no memory space> [shape: s32[1], index: 0, kind: input, shape index: {}]
  %s1 = inlined_call_operand.hbm [shape: f32[16,128], index: 1, kind: input, shape index: {}]
  %s2 = inlined_call_operand.hbm [shape: f32[16,128], index: 2, kind: input, shape index: {}]
  %s3 = inlined_call_operand.hbm [shape: f32[8,128], index: 3, kind: output, shape index: {}]
  %s4 = sld [smem:[#allocation0]]
  $region26: #{tpu_custom_call.1} parent=0
    _
  %s6 = ssub.s32 1, %s4
  %s7 = scalar_select 0, %s6, %s4
  %8 = sst [smem:[#allocation3]] %s0
  $region1: #{tpu_custom_call.1} parent=0
    #allocation4 [shape = 'u8[8192]{0}', space=vmem, size = 0x2000, scoped, tag = 'input window, operand 1, single buffered']
    #allocation5 [shape = 's32[1]{0}', space=sflag, size = 0x4, scoped, tag = 'scoped memory for tpu_custom_call.1']
    #allocation6 [shape = 's32[1]{0}', space=sflag, size = 0x4, scoped, tag = 'scoped memory for tpu_custom_call.1']
    #allocation7 [shape = 'u8[8192]{0}', space=vmem, size = 0x2000, scoped, tag = 'input window, operand 2, single buffered']
    #allocation8 [shape = 's32[1]{0}', space=sflag, size = 0x4, scoped, tag = 'scoped memory for tpu_custom_call.1']
    #allocation9 [shape = 'u8[4096]{0}', space=vmem, size = 0x1000, scoped, tag = 'output window, operand 0, single buffered']
    %9 = vsyncpa [#allocation5], 0
    %10 = vsyncpa [#allocation8], 0
    %11 = vsyncpa [#allocation6], 0
    // Predicated region
    $region2: #{tpu_custom_call.1} parent=1 // pred_check
      _
    $region3: #{tpu_custom_call.1} parent=1 // pred_check_branch
      %13 = sbr.rel (0) target = $region5
    $region4: #{tpu_custom_call.1} parent=1 // pred_region
      %s15 = ssub.s32 256, 256
      %16 = vsyncadd [#allocation5], %s15
      %s17 = sshll.u32 [#allocation4], 4
      %s18 = int_to_ptr.vmem [resolvable:$true] %s17
      %23 = dma.hbm_to_vmem [thread:$0]  %s1, 256, %s18, [#allocation5], 128, 128, 8
    $region5: #{tpu_custom_call.1} parent=1 // pred_fallthru
      _
    // Predicated region
    $region6: #{tpu_custom_call.1} parent=1 // pred_check
      _
    $region7: #{tpu_custom_call.1} parent=1 // pred_check_branch
      %25 = sbr.rel (0) target = $region9
    $region8: #{tpu_custom_call.1} parent=1 // pred_region
      %s27 = ssub.s32 256, 256
      %28 = vsyncadd [#allocation8], %s27
      %s29 = sshll.u32 [#allocation7], 4
      %s30 = int_to_ptr.vmem [resolvable:$true] %s29
      %35 = dma.hbm_to_vmem [thread:$0]  %s2, 256, %s30, [#allocation8], 128, 128, 8
    $region9: #{tpu_custom_call.1} parent=1 // pred_fallthru
      _
    // Predicated region
    $region10: #{tpu_custom_call.1} parent=1 // pred_check
      _
    $region11: #{tpu_custom_call.1} parent=1 // pred_check_branch
      %37 = sbr.rel (0) target = $region13
    $region12: #{tpu_custom_call.1} parent=1 // pred_region
      %38 = dma.done [#allocation5], 256
    $region13: #{tpu_custom_call.1} parent=1 // pred_fallthru
      _
    // Predicated region
    $region14: #{tpu_custom_call.1} parent=1 // pred_check
      _
    $region15: #{tpu_custom_call.1} parent=1 // pred_check_branch
      %40 = sbr.rel (0) target = $region17
    $region16: #{tpu_custom_call.1} parent=1 // pred_region
      %41 = dma.done [#allocation8], 256
    $region17: #{tpu_custom_call.1} parent=1 // pred_fallthru
      _
    %v42 = vld [vmem:[#allocation4] sm:$0xff]
    %v43 = vld [vmem:[#allocation4 + $0x8] sm:$0xff]
    %v44 = vld [vmem:[#allocation7] sm:$0xff]
    %v45 = vld [vmem:[#allocation7 + $0x8] sm:$0xff]
    %v46 = vand.u32 2147483647, %v42
    %v47 = vand.u32 2147483647, %v43
    %v48 = vsub.f32 0.0, %v46
    %v49 = vsub.f32 0.0, %v47
    %v50 = vmul.f32 %v48, 1.442695
    %v51 = vpow.pop %v50
    %v52 = vmul.f32 %v49, 1.442695
    %v53 = vpow.pop %v52
    %v54 = vadd.f32 %v51, 1.0
    %v55 = vlog2.pop %v54
    %v56 = vmul.f32 %v55, 0.6931472
    %v57 = vmul.f32 -0.5, %v51
    %v58 = vadd.f32 %v57, 1.0
    %v59 = vmul.f32 %v58, %v51
    %v60 = vand.u32 2147483647, %v51
    %vm61 = vcmp.lt.f32.partialorder %v60, 0.0004427343
    %v62 = vsel %vm61, %v59, %v56
    %v63 = vadd.f32 %v53, 1.0
    %v64 = vlog2.pop %v63
    %v65 = vmul.f32 %v64, 0.6931472
    %v66 = vmul.f32 -0.5, %v53
    %v67 = vadd.f32 %v66, 1.0
    %v68 = vmul.f32 %v67, %v53
    %v69 = vand.u32 2147483647, %v53
    %vm70 = vcmp.lt.f32.partialorder %v69, 0.0004427343
    %v71 = vsel %vm70, %v68, %v65
    %v72 = vmin.f32 %v42, 0.0
    %v73 = vmin.f32 %v43, 0.0
    %v74 = vsub.f32 %v72, %v62
    %v75 = vsub.f32 %v73, %v71
    %v76 = vsub.f32 0.0, %v42
    %v77 = vsub.f32 0.0, %v43
    %v78 = vmin.f32 %v76, 0.0
    %v79 = vmin.f32 %v77, 0.0
    %v80 = vsub.f32 %v78, %v62
    %v81 = vsub.f32 %v79, %v71
    %v82 = vmax.f32 %v74, -27.631021
    %v83 = vmax.f32 %v75, -27.631021
    %v84 = vadd.f32 %v51, 1.0
    %v85 = vadd.f32 %v53, 1.0
    %v86 = vrcp.pop %v84
    %v87 = vmul.f32 1.0, %v86
    %v88 = vrcp.pop %v85
    %v89 = vmul.f32 1.0, %v88
    %vm90 = vcmp.ge.f32.partialorder %v42, 0.0
    %vm91 = vcmp.ge.f32.partialorder %v43, 0.0
    %v92 = vsel %vm90, 1.0, %v51
    %v93 = vsel %vm91, 1.0, %v53
    %v94 = vmul.f32 %v92, %v87
    %v95 = vmul.f32 %v93, %v89
    %v96 = vsel %vm90, %v51, 1.0
    %v97 = vsel %vm91, %v53, 1.0
    %v98 = vmul.f32 %v96, %v87
    %v99 = vmul.f32 %v97, %v89
    %v100 = vmul.f32 %v98, %v98
    %v101 = vmul.f32 %v99, %v99
    %v102 = vmul.f32 %v94, %v94
    %v103 = vmul.f32 %v95, %v95
    %v104 = vmul.f32 %v100, -0.25
    %v105 = vmul.f32 %v101, -0.25
    %v106 = vmul.f32 %v104, %v44
    %v107 = vmul.f32 %v105, %v45
    %v108 = vmul.f32 %v106, %v82
    %v109 = vmul.f32 %v107, %v83
    %v110 = vmul.f32 %v102, 0.75
    %v111 = vmul.f32 %v103, 0.75
    %v112 = vsub.f32 1.0, %v44
    %v113 = vsub.f32 1.0, %v45
    %v114 = vmul.f32 %v110, %v112
    %v115 = vmul.f32 %v111, %v113
    %v116 = vmul.f32 %v114, %v80
    %v117 = vmul.f32 %v115, %v81
    %v118 = vsub.f32 %v108, %v116
    %v119 = vsub.f32 %v109, %v117
    %v120 = vadd.f32 %v118, %v119
    %121 = vst [vmem:[#allocation9] sm:$0xff] %v120
    // Predicated region
    $region18: #{tpu_custom_call.1} parent=1 // pred_check
      _
    $region19: #{tpu_custom_call.1} parent=1 // pred_check_branch
      %123 = sbr.rel (0) target = $region21
    $region20: #{tpu_custom_call.1} parent=1 // pred_region
      %s125 = ssub.s32 128, 128
      %126 = vsyncadd [#allocation6], %s125
      %s128 = sshll.u32 [#allocation9], 4
      %s129 = int_to_ptr.vmem [resolvable:$true] %s128
      %131 = dma.vmem_to_hbm [thread:$0]  %s129, 128, %s3, [#allocation6]
    $region21: #{tpu_custom_call.1} parent=1 // pred_fallthru
      _
    // Predicated region
    $region22: #{tpu_custom_call.1} parent=1 // pred_check
      _
    $region23: #{tpu_custom_call.1} parent=1 // pred_check_branch
      %133 = sbr.rel (0) target = $region25
    $region24: #{tpu_custom_call.1} parent=1 // pred_region
      %134 = dma.done [#allocation6], 128
    $region25: #{tpu_custom_call.1} parent=1 // pred_fallthru
      _
    %135 = vsyncpa [#allocation5], 1
    %136 = vsyncpa [#allocation8], 1
    %137 = vsyncpa [#allocation6], 1

</llo_original>
